<compile_context>
chip_gen: v7x
topology: tpu7x:2x2x1
jax: 0.10.0
libtpu: 0.0.40
codegen_flags: <defaults>
</compile_context>

<pallas_src>
import numpy as np
import jax
import jax.numpy as jnp
from jax import lax
from jax.experimental import pallas as pl
from jax.experimental.pallas import tpu as pltpu


def build_laplacian(nv: int, faces: np.ndarray) -> np.ndarray:
    """Same construction as LaplacianLoss.__init__ (plain numpy glue)."""
    laplacian = np.zeros([nv, nv], dtype=np.float32)
    laplacian[faces[:, 0], faces[:, 1]] = -1
    laplacian[faces[:, 1], faces[:, 0]] = -1
    laplacian[faces[:, 1], faces[:, 2]] = -1
    laplacian[faces[:, 2], faces[:, 1]] = -1
    laplacian[faces[:, 2], faces[:, 0]] = -1
    laplacian[faces[:, 0], faces[:, 2]] = -1
    r, c = np.diag_indices(nv)
    laplacian[r, c] = -laplacian.sum(1)
    for i in range(nv):
        if laplacian[i, i] != 0:
            laplacian[i, :] /= laplacian[i, i]
    return laplacian


def _round_up(a: int, b: int) -> int:
    return ((a + b - 1) // b) * b


def _laplacian_loss_kernel(mask_ref, kmap_ref, lap_ref, x_ref, o_ref, acc_ref):
    # mask_ref/kmap_ref: SMEM (nI, nK) i32 scalar-prefetch (kmap only drives the
    # index_map); lap_ref: (T, T); x_ref: (T, 128); o_ref: (1, 1, 128) f32;
    # acc_ref: (T, 128) f32 VMEM scratch.
    i = pl.program_id(0)
    k = pl.program_id(1)

    @pl.when(k == 0)
    def _():
        acc_ref[...] = jnp.zeros_like(acc_ref)

    # Skip all-zero Laplacian tiles entirely; for those steps the lap index_map
    # already pointed at an already-resident tile, so no DMA was issued either.
    @pl.when(mask_ref[i, k] != 0)
    def _():
        acc_ref[...] += jnp.dot(
            lap_ref[...], x_ref[...], preferred_element_type=jnp.float32
        )

    @pl.when(k == pl.num_programs(1) - 1)
    def _():
        y = acc_ref[...]
        # Square on the VPU, reduce the (dense) row-tile axis, store one
        # lane-dense block per row tile.
        o_ref[...] = jnp.sum(y * y, axis=0, keepdims=True).reshape(o_ref.shape)


def laplacian_loss(laplacian: jax.Array, x: jax.Array, average: bool = False,
                   *, block: int = 512, compute_dtype=jnp.bfloat16):
    """laplacian: (nv, nv) f32, x: (B, nv, C) f32 -> (B,) f32 (scalar if average)."""
    nv = laplacian.shape[0]
    B, nv_x, C = x.shape
    assert nv_x == nv
    N = B * C

    # ---- wrapper-side layout plumbing (lane-dense operands) -----------------
    T = min(_round_up(nv, 128), _round_up(block, 128))   # tile edge, 128-aligned
    nvp = _round_up(nv, T)                               # padded vertex count
    n_lane = _round_up(N, 128)                           # lane-dense RHS width

    lap_p = jnp.zeros((nvp, nvp), jnp.float32).at[:nv, :nv].set(laplacian)
    xw = jnp.transpose(x, (1, 0, 2)).reshape(nv, N)      # (nv, B*C), col = b*C + c
    xw = jnp.zeros((nvp, n_lane), x.dtype).at[:nv, :N].set(xw)

    nI = nvp // T
    nK = nvp // T

    # ---- block-sparsity metadata (cheap; in a real module precompute this
    #      once at __init__ alongside the laplacian buffer) -------------------
    tile_nz = jnp.any(
        lap_p.reshape(nI, T, nK, T) != 0.0, axis=(1, 3)).astype(jnp.int32)
    kidx = jnp.arange(nK, dtype=jnp.int32)[None, :]
    # For zero tiles, point the index_map at the last nonzero tile of this row
    # already fetched (leading zeros clamp to tile 0) -> the pipeline sees a
    # repeated block index and elides the DMA.
    kmap = jnp.maximum(
        lax.cummax(jnp.where(tile_nz != 0, kidx, -1), axis=1), 0
    ).astype(jnp.int32)

    lap_c = lap_p.astype(compute_dtype)
    x_c = xw.astype(compute_dtype)

    itemsize = jnp.dtype(compute_dtype).itemsize
    cost = pl.CostEstimate(
        flops=2 * nv * nv * N,
        transcendentals=0,
        bytes_accessed=nv * nv * itemsize + nv * N * itemsize + nI * n_lane * 4,
    )

    grid_spec = pltpu.PrefetchScalarGridSpec(
        num_scalar_prefetch=2,
        grid=(nI, nK),
        in_specs=[
            pl.BlockSpec((T, T), lambda i, k, nz, km: (i, km[i, k])),
            pl.BlockSpec((T, n_lane), lambda i, k, nz, km: (k, 0)),
        ],
        out_specs=pl.BlockSpec((1, 1, n_lane), lambda i, k, nz, km: (i, 0, 0)),
        scratch_shapes=[pltpu.VMEM((T, n_lane), jnp.float32)],
    )

    partial = pl.pallas_call(
        _laplacian_loss_kernel,
        out_shape=jax.ShapeDtypeStruct((nI, 1, n_lane), jnp.float32),
        grid_spec=grid_spec,
        compiler_params=pltpu.CompilerParams(
            dimension_semantics=("parallel", "arbitrary"),
            vmem_limit_bytes=48 * 1024 * 1024,
        ),
        cost_estimate=cost,
    )(tile_nz, kmap, lap_c, x_c)

    # Tiny finalization: sum row-tile partials, fold C columns per batch, *1/nv.
    col_sums = jnp.sum(partial, axis=(0, 1))             # (n_lane,)
    per_batch = jnp.sum(col_sums[:N].reshape(B, C), axis=1) * (1.0 / nv)
    if average:
        return jnp.sum(per_batch) / B
    return per_batch


if __name__ == "__main__":
    # Small deterministic mesh: nv vertices on a ring, faces (i, i+1, i+2).
    B, nv, C = 2, 512, 3
    faces = np.stack(
        [np.arange(nv), (np.arange(nv) + 1) % nv, (np.arange(nv) + 2) % nv],
        axis=1,
    ).astype(np.int64)

    lap_np = build_laplacian(nv, faces)
    lap = jnp.asarray(lap_np)
    x = jax.random.normal(jax.random.PRNGKey(0), (B, nv, C), dtype=jnp.float32)

    # block=128 -> 4x4 tile grid, which also exercises the zero-tile skip path.
    out = jax.block_until_ready(laplacian_loss(lap, x, average=False, block=128))
    avg = jax.block_until_ready(laplacian_loss(lap, x, average=True, block=128))

    # References in float64 numpy (so reference matmul precision is unambiguous).
    x64 = np.asarray(x, dtype=np.float64)
    lap64 = lap_np.astype(np.float64)
    ref_exact = (np.einsum("ij,bjk->bik", lap64, x64) ** 2).sum(axis=(1, 2)) / nv

    # Kernel streams bf16 operands with f32 accumulation: check tightly against
    # the bf16-rounded-input reference and loosely against the exact one.
    lap_bf = np.asarray(jnp.asarray(lap_np).astype(jnp.bfloat16).astype(jnp.float32),
                        dtype=np.float64)
    x_bf = np.asarray(x.astype(jnp.bfloat16).astype(jnp.float32), dtype=np.float64)
    ref_bf = (np.einsum("ij,bjk->bik", lap_bf, x_bf) ** 2).sum(axis=(1, 2)) / nv

    assert out.shape == (B,)
    np.testing.assert_allclose(np.asarray(out), ref_bf, rtol=1e-4, atol=1e-6)
    np.testing.assert_allclose(np.asarray(out), ref_exact, rtol=5e-2, atol=1e-4)
    np.testing.assert_allclose(float(avg), float(ref_bf.sum() / B),
                               rtol=1e-4, atol=1e-6)

    print("KERNEL_OK")
</pallas_src>

<mosaic_0001>
module attributes {stable_mosaic.version = 11 : i64} {
  func.func @_laplacian_loss_kernel(%arg0: i32, %arg1: i32, %arg2: memref<4x4xi32, #tpu.memory_space<smem>>, %arg3: memref<4x4xi32, #tpu.memory_space<smem>>, %arg4: memref<128x128xbf16, #tpu.memory_space<vmem>>, %arg5: memref<128x128xbf16, #tpu.memory_space<vmem>>, %arg6: memref<1x1x128xf32, #tpu.memory_space<vmem>>, %arg7: memref<128x128xf32, #tpu.memory_space<vmem>>) attributes {dimension_semantics = [#tpu.dimension_semantics<parallel>, #tpu.dimension_semantics<arbitrary>], iteration_bounds = array<i64: 4, 4>, scalar_prefetch = 2 : i64, scratch_operands = 1 : i64, tpu.core_type = #tpu.core_type<tc>, window_params = [{transform_indices = @transform_0, window_bounds = array<i64: 128, 128>}, {transform_indices = @transform_1, window_bounds = array<i64: 128, 128>}, {transform_indices = @transform_2, window_bounds = array<i64: 1, 1, 128>}]} {
    %c0_i32 = arith.constant 0 : i32
    %0 = arith.cmpi eq, %arg1, %c0_i32 : i32
    %1 = arith.extui %0 : i1 to i32
    %c0_i32_0 = arith.constant 0 : i32
    %2 = arith.cmpi ne, %1, %c0_i32_0 : i32
    scf.if %2 {
      %cst = arith.constant 0.000000e+00 : f32
      %12 = vector.broadcast %cst : f32 to vector<128x128xf32>
      %c0 = arith.constant 0 : index
      %c0_4 = arith.constant 0 : index
      %13 = vector.load %arg7[%c0, %c0_4] : memref<128x128xf32, #tpu.memory_space<vmem>>, vector<128x128xf32>
      tpu.vector_store %arg7[%c0, %c0_4], %12 {strides = array<i32>} : memref<128x128xf32, #tpu.memory_space<vmem>>, vector<128x128xf32>,
    } else {
    }
    %3 = arith.index_cast %arg0 : i32 to index
    %4 = arith.index_cast %arg1 : i32 to index
    %5 = memref.load %arg2[%3, %4] : memref<4x4xi32, #tpu.memory_space<smem>>
    %c0_i32_1 = arith.constant 0 : i32
    %6 = arith.cmpi ne, %5, %c0_i32_1 : i32
    %7 = arith.extui %6 : i1 to i32
    %c0_i32_2 = arith.constant 0 : i32
    %8 = arith.cmpi ne, %7, %c0_i32_2 : i32
    scf.if %8 {
      %c0 = arith.constant 0 : index
      %c0_4 = arith.constant 0 : index
      %12 = vector.load %arg7[%c0, %c0_4] : memref<128x128xf32, #tpu.memory_space<vmem>>, vector<128x128xf32>
      %c0_5 = arith.constant 0 : index
      %c0_6 = arith.constant 0 : index
      %13 = vector.load %arg4[%c0_5, %c0_6] : memref<128x128xbf16, #tpu.memory_space<vmem>>, vector<128x128xbf16>
      %c0_7 = arith.constant 0 : index
      %c0_8 = arith.constant 0 : index
      %14 = vector.load %arg5[%c0_7, %c0_8] : memref<128x128xbf16, #tpu.memory_space<vmem>>, vector<128x128xbf16>
      %cst = arith.constant dense<0.000000e+00> : vector<128x128xf32>
      %15 = tpu.matmul %13, %14, %cst {dimension_numbers = #tpu.dot_dimension_numbers<[1], [0], [0], [1], [0, 0, 1, 1], [], []>} : vector<128x128xbf16>, vector<128x128xbf16>, vector<128x128xf32> -> vector<128x128xf32>
      %16 = arith.addf %12, %15 : vector<128x128xf32>
      %c0_9 = arith.constant 0 : index
      %c0_10 = arith.constant 0 : index
      %17 = vector.load %arg7[%c0_9, %c0_10] : memref<128x128xf32, #tpu.memory_space<vmem>>, vector<128x128xf32>
      tpu.vector_store %arg7[%c0_9, %c0_10], %16 {strides = array<i32>} : memref<128x128xf32, #tpu.memory_space<vmem>>, vector<128x128xf32>,
    } else {
    }
    %c3_i32 = arith.constant 3 : i32
    %9 = arith.cmpi eq, %arg1, %c3_i32 : i32
    %10 = arith.extui %9 : i1 to i32
    %c0_i32_3 = arith.constant 0 : i32
    %11 = arith.cmpi ne, %10, %c0_i32_3 : i32
    scf.if %11 {
      %c0 = arith.constant 0 : index
      %c0_4 = arith.constant 0 : index
      %12 = vector.load %arg7[%c0, %c0_4] : memref<128x128xf32, #tpu.memory_space<vmem>>, vector<128x128xf32>
      %13 = arith.mulf %12, %12 : vector<128x128xf32>
      %cst = arith.constant dense<0.000000e+00> : vector<128xf32>
      %14 = vector.multi_reduction <add>, %13, %cst [0] : vector<128x128xf32> to vector<128xf32>
      %15 = vector.shape_cast %14 : vector<128xf32> to vector<1x128xf32>
      %16 = vector.shape_cast %15 : vector<1x128xf32> to vector<1x1x128xf32>
      %c0_5 = arith.constant 0 : index
      %c0_6 = arith.constant 0 : index
      %c0_7 = arith.constant 0 : index
      %17 = vector.load %arg6[%c0_5, %c0_6, %c0_7] : memref<1x1x128xf32, #tpu.memory_space<vmem>>, vector<1x1x128xf32>
      tpu.vector_store %arg6[%c0_5, %c0_6, %c0_7], %16 {strides = array<i32>} : memref<1x1x128xf32, #tpu.memory_space<vmem>>, vector<1x1x128xf32>,
    } else {
    }
    return
  }
  func.func @transform_0(%arg0: i32, %arg1: i32, %arg2: memref<4x4xi32, #tpu.memory_space<smem>>, %arg3: memref<4x4xi32, #tpu.memory_space<smem>>) -> (i32, i32) {
    %0 = arith.index_cast %arg0 : i32 to index
    %1 = arith.index_cast %arg1 : i32 to index
    %2 = memref.load %arg3[%0, %1] : memref<4x4xi32, #tpu.memory_space<smem>>
    %c0_i32 = arith.constant 0 : i32
    return %arg0, %2 : i32, i32
  }
  func.func @transform_1(%arg0: i32, %arg1: i32, %arg2: memref<4x4xi32, #tpu.memory_space<smem>>, %arg3: memref<4x4xi32, #tpu.memory_space<smem>>) -> (i32, i32) {
    %c0_i32 = arith.constant 0 : i32
    %c0_i32_0 = arith.constant 0 : i32
    return %arg1, %c0_i32 : i32, i32
  }
  func.func @transform_2(%arg0: i32, %arg1: i32, %arg2: memref<4x4xi32, #tpu.memory_space<smem>>, %arg3: memref<4x4xi32, #tpu.memory_space<smem>>) -> (i32, i32, i32) {
    %c0_i32 = arith.constant 0 : i32
    %c0_i32_0 = arith.constant 0 : i32
    %c0_i32_1 = arith.constant 0 : i32
    return %arg0, %c0_i32, %c0_i32_0 : i32, i32, i32
  }
}

</mosaic_0001>

<llo_original>
// kernel: tpu_custom_call.1
$region0: #{tpu_custom_call.1}
  #allocation0 [shape = 'u32[]', space=smem, size = 0x4, offset = 0x4, fixed_abs, tag = 'smem constant byte address 0x4 - core index']
  #allocation1 [shape = 'u32[144,128]{1,0:T(1,128)}', space=vmem, size = 0x12000, scoped, tag = 'internal scratch']
  #allocation2 [shape = 'f32[128,128]{1,0:T(8,128)}', space=vmem, size = 0x10000, scoped, tag = 'scratch operand']
  #allocation3 [shape = 's32[1]{0}', space=sflag, size = 0x4, scoped, tag = 'scoped memory for tpu_custom_call.1']
  #allocation4 [shape = 'u8[2048]{0}', space=smem, size = 0x800, scoped, tag = 'prefetched SMEM operand 0']
  #allocation5 [shape = 'u8[2048]{0}', space=smem, size = 0x800, scoped, tag = 'prefetched SMEM operand 1']
  %s0 = inlined_call_operand.hbm [shape: s32[4,4], index: 0, kind: input, shape index: {}]
  %s1 = inlined_call_operand.hbm [shape: s32[4,4], index: 1, kind: input, shape index: {}]
  %s2 = inlined_call_operand.hbm [shape: bf16[512,512], index: 2, kind: input, shape index: {}]
  %s3 = inlined_call_operand.hbm [shape: bf16[512,128], index: 3, kind: input, shape index: {}]
  %s4 = inlined_call_operand.hbm [shape: f32[4,1,128], index: 4, kind: output, shape index: {}]
  %s5 = sld [smem:[#allocation0]]
  $region61: #{tpu_custom_call.1} parent=0
    _
  %s7 = ssub.s32 1, %s5
  %s8 = scalar_select 0, %s7, %s5
  %10 = dma.hbm_to_smem %s0, 64, [#allocation4], [#allocation3]
  %12 = dma.hbm_to_smem %s1, 64, [#allocation5], [#allocation3]
  %13 = dma.done [#allocation3], 128
  %14 = sfence
  $region1: #{tpu_custom_call.1} parent=0
    #allocation6 [shape = 'u8[65536]{0}', space=vmem, size = 0x10000, scoped, tag = 'input window, operand 2']
    #allocation7 [shape = 's32[2]{0}', space=sflag, size = 0x8, scoped, tag = 'scoped memory for tpu_custom_call.1']
    #allocation8 [shape = 's32[2]{0}', space=sflag, size = 0x8, scoped, tag = 'scoped memory for tpu_custom_call.1']
    #allocation9 [shape = 'u8[65536]{0}', space=vmem, size = 0x10000, scoped, tag = 'input window, operand 3']
    #allocation10 [shape = 's32[2]{0}', space=sflag, size = 0x8, scoped, tag = 'scoped memory for tpu_custom_call.1']
    #allocation11 [shape = 'u8[1024]{0}', space=vmem, size = 0x400, scoped, tag = 'output window, operand 0']
    %15 = vsyncpa [#allocation7], 0
    %s16 = scalar_lea.sflag [#allocation7], 1
    %17 = vsyncpa %s16, 0
    %18 = vsyncpa [#allocation10], 0
    %s19 = scalar_lea.sflag [#allocation10], 1
    %20 = vsyncpa %s19, 0
    %21 = vsyncpa [#allocation8], 0
    %s22 = scalar_lea.sflag [#allocation8], 1
    %23 = vsyncpa %s22, 0
    loop: start=0, step=1, limit=18
    $region2: #{tpu_custom_call.1} parent=1 // loop_pre_header
      _
    $region3: #{tpu_custom_call.1} parent=1 // loop_header
      %s25 = sphi 0, %s29
      %p26 = scmp.ge.s32.totalorder %s25, 18
      %s32 = sphi 0, %s44
      %s33 = sphi 0, %s40
      %s34 = sphi 0, %s32
      %s35 = sphi 0, %s33
      %s36 = sphi 0, %s34
      %s37 = sphi 0, %s35
      %s65 = sphi 0, %s67
      %s68 = sphi 0, %s65
      %s69 = sphi 0, %s68
      %s85 = sphi 0, %s69
      %s91 = sphi 0, %s93
      %s94 = sphi 0, %s91
      %s95 = sphi 0, %s94
      %s111 = sphi 0, %s95
      %s117 = sphi 0, %s119
      %s120 = sphi 0, %s117
      %s121 = sphi 0, %s120
      %s137 = sphi 0, %s121
    $region4: #{tpu_custom_call.1} parent=1 // loop_header_branch
      %28 = sbr.rel (%p26) target = $region8
    $region5: #{tpu_custom_call.1} parent=1 // loop_body
      %s30 = ssub.s32 %s25, 1
      %s31 = ssub.s32 %s25, 2
      %s38 = sadd.s32 1, %s33
      %p39 = scmp.ge.s32.totalorder %s38, 4
      %s40 = scalar_select %p39, 0, %s38
      %s41 = sadd.s32 1, %s32
      %s42 = scalar_select %p39, %s41, %s32
      %p43 = scmp.ge.s32.totalorder %s42, 4
      %s44 = scalar_select %p43, 0, %s42
      %s45 = sshra.s32 %s33, 7
      %s46 = sand.u32 %s33, 127
      %s47 = sadd.s32 %s45, %s32
      %s48 = smul.u32 %s47, 128
      %s49 = sshra.s32 %s33, 7
      %s50 = sand.u32 %s33, 127
      %s51 = sadd.s32 %s48, %s50
      %s52 = sld [smem:[#allocation5 + %s51]]
      %s53 = sshra.s32 %s40, 7
      %s54 = sand.u32 %s40, 127
      %s55 = sadd.s32 %s53, %s44
      %s56 = smul.u32 %s55, 128
      %s57 = sshra.s32 %s40, 7
      %s58 = sand.u32 %s40, 127
      %s59 = sadd.s32 %s56, %s58
      %s60 = sld [smem:[#allocation5 + %s59]]
      %s61 = ssub.s32 %s32, %s44
      %s62 = ssub.s32 %s52, %s60
      %s63 = sor.u32 %s61, %s62
      %p64 = scmp.eq.s32.totalorder %s63, 0
      %s66 = sadd.s32 %s65, 1
      %s67 = scalar_select %p64, %s65, %s66
      %p70 = pneg %p64
      %p71 = scmp.eq.s32.totalorder %s25, 15
      %p72 = por %p70, %p71
      %p73 = scmp.ne.s32.totalorder %s65, %s68
      %p74 = scmp.eq.s32.totalorder %s25, 0
      %p75 = por %p73, %p74
      %p76 = scmp.ne.s32.totalorder %s65, %s68
      %p77 = scmp.eq.s32.totalorder %s30, 15
      %p78 = por %p76, %p77
      %p79 = scmp.ne.s32.totalorder %s68, %s69
      %p80 = scmp.eq.s32.totalorder %s30, 0
      %p81 = por %p79, %p80
      %p82 = scmp.ne.s32.totalorder %s68, %s69
      %p83 = scmp.eq.s32.totalorder %s31, 15
      %p84 = por %p82, %p83
      %p86 = scmp.ne.s32.totalorder %s69, %s85
      %p87 = scmp.eq.s32.totalorder %s31, 0
      %p88 = por %p86, %p87
      %s89 = ssub.s32 %s33, %s40
      %p90 = scmp.eq.s32.totalorder %s89, 0
      %s92 = sadd.s32 %s91, 1
      %s93 = scalar_select %p90, %s91, %s92
      %p96 = pneg %p90
      %p97 = scmp.eq.s32.totalorder %s25, 15
      %p98 = por %p96, %p97
      %p99 = scmp.ne.s32.totalorder %s91, %s94
      %p100 = scmp.eq.s32.totalorder %s25, 0
      %p101 = por %p99, %p100
      %p102 = scmp.ne.s32.totalorder %s91, %s94
      %p103 = scmp.eq.s32.totalorder %s30, 15
      %p104 = por %p102, %p103
      %p105 = scmp.ne.s32.totalorder %s94, %s95
      %p106 = scmp.eq.s32.totalorder %s30, 0
      %p107 = por %p105, %p106
      %p108 = scmp.ne.s32.totalorder %s94, %s95
      %p109 = scmp.eq.s32.totalorder %s31, 15
      %p110 = por %p108, %p109
      %p112 = scmp.ne.s32.totalorder %s95, %s111
      %p113 = scmp.eq.s32.totalorder %s31, 0
      %p114 = por %p112, %p113
      %s115 = ssub.s32 %s32, %s44
      %p116 = scmp.eq.s32.totalorder %s115, 0
      %s118 = sadd.s32 %s117, 1
      %s119 = scalar_select %p116, %s117, %s118
      %p122 = pneg %p116
      %p123 = scmp.eq.s32.totalorder %s25, 15
      %p124 = por %p122, %p123
      %p125 = scmp.ne.s32.totalorder %s117, %s120
      %p126 = scmp.eq.s32.totalorder %s25, 0
      %p127 = por %p125, %p126
      %p128 = scmp.ne.s32.totalorder %s117, %s120
      %p129 = scmp.eq.s32.totalorder %s30, 15
      %p130 = por %p128, %p129
      %p131 = scmp.ne.s32.totalorder %s120, %s121
      %p132 = scmp.eq.s32.totalorder %s30, 0
      %p133 = por %p131, %p132
      %p134 = scmp.ne.s32.totalorder %s120, %s121
      %p135 = scmp.eq.s32.totalorder %s31, 15
      %p136 = por %p134, %p135
      %p138 = scmp.ne.s32.totalorder %s121, %s137
      %p139 = scmp.eq.s32.totalorder %s31, 0
      %p140 = por %p138, %p139
      %p141 = scmp.le.s32.totalorder 1, %s25
      %p142 = scmp.lt.s32.totalorder %s25, 17
      %p143 = pnand %p141, %p142
      %p144 = pneg %p143
      // Predicated region
      $region9: #{tpu_custom_call.1} parent=5 // pred_check
        _
      $region10: #{tpu_custom_call.1} parent=5 // pred_check_branch
        %146 = sbr.rel (%p143) target = $region12
      $region11: #{tpu_custom_call.1} parent=5 // pred_region
        %s147 = ssub.s32 %s25, 1
      $region12: #{tpu_custom_call.1} parent=5 // pred_fallthru
        _
      %p148 = scmp.lt.s32.totalorder %s25, 16
      // Predicated region
      $region13: #{tpu_custom_call.1} parent=5 // pred_check
        %p149 = pneg %p148
      $region14: #{tpu_custom_call.1} parent=5 // pred_check_branch
        %151 = sbr.rel (%p149) target = $region16
      $region15: #{tpu_custom_call.1} parent=5 // pred_region
        // Predicated region
        $region17: #{tpu_custom_call.1} parent=15 // pred_check
          %p152 = pneg %p75
        $region18: #{tpu_custom_call.1} parent=15 // pred_check_branch
          %154 = sbr.rel (%p152) target = $region20
        $region19: #{tpu_custom_call.1} parent=15 // pred_region
          %s155 = sand.u32 %s65, 1
          %s156 = scalar_lea.sflag [#allocation7], %s155
          %s157 = sand.u32 %s65, 1
          %s158 = smul.addr %s157, 64
          %s159 = scalar_lea.vmem [#allocation6], %s158
          %s160 = sshra.s32 %s33, 7
          %s161 = sand.u32 %s33, 127
          %s162 = sadd.s32 %s160, %s32
          %s163 = smul.u32 %s162, 128
          %s164 = sshra.s32 %s33, 7
          %s165 = sand.u32 %s33, 127
          %s166 = sadd.s32 %s163, %s165
          %s167 = sld [smem:[#allocation5 + %s166]]
          %s168 = smul.u32 16, %s32
          %s170 = ssub.s32 1024, 1024
          %171 = vsyncadd %s156, %s170
          %s172 = smul.addr %s168, 4
          %s173 = sadd.s32 %s167, %s172
          %s174 = smul.addr %s173, 64
          %s175 = scalar_lea.hbm %s2, %s174
          %s176 = sshll.u32 %s159, 4
          %s177 = int_to_ptr.vmem [resolvable:$true] %s176
          %182 = dma.hbm_to_vmem [thread:$0]  %s175, 1024, %s177, %s156, 256, 64, 4
        $region20: #{tpu_custom_call.1} parent=15 // pred_fallthru
          _
        // Predicated region
        $region21: #{tpu_custom_call.1} parent=15 // pred_check
          %p183 = pneg %p101
        $region22: #{tpu_custom_call.1} parent=15 // pred_check_branch
          %185 = sbr.rel (%p183) target = $region24
        $region23: #{tpu_custom_call.1} parent=15 // pred_region
          %s186 = sand.u32 %s91, 1
          %s187 = scalar_lea.sflag [#allocation10], %s186
          %s188 = sand.u32 %s91, 1
          %s189 = smul.addr %s188, 64
          %s190 = scalar_lea.vmem [#allocation9], %s189
          %s191 = smul.u32 16, %s33
          %s193 = ssub.s32 1024, 1024
          %194 = vsyncadd %s187, %s193
          %s195 = smul.addr %s191, 64
          %s196 = scalar_lea.hbm %s3, %s195
          %s197 = sshll.u32 %s190, 4
          %s198 = int_to_ptr.vmem [resolvable:$true] %s197
          %203 = dma.hbm_to_vmem [thread:$0]  %s196, 1024, %s198, %s187, 64, 64, 4
        $region24: #{tpu_custom_call.1} parent=15 // pred_fallthru
          _
      $region16: #{tpu_custom_call.1} parent=5 // pred_fallthru
        _
      %p204 = scmp.le.s32.totalorder 1, %s25
      %p205 = scmp.lt.s32.totalorder %s25, 17
      %p206 = pnand %p204, %p205
      %p207 = pneg %p206
      // Predicated region
      $region25: #{tpu_custom_call.1} parent=5 // pred_check
        _
      $region26: #{tpu_custom_call.1} parent=5 // pred_check_branch
        %209 = sbr.rel (%p206) target = $region28
      $region27: #{tpu_custom_call.1} parent=5 // pred_region
        %s210 = ssub.s32 %s25, 1
        %s211 = sand.u32 %s68, 1
        %s212 = scalar_lea.sflag [#allocation7], %s211
        %s213 = sand.u32 %s68, 1
        %s214 = smul.addr %s213, 64
        %s215 = scalar_lea.vmem [#allocation6], %s214
        // Predicated region
        $region29: #{tpu_custom_call.1} parent=27 // pred_check
          %p216 = pneg %p81
        $region30: #{tpu_custom_call.1} parent=27 // pred_check_branch
          %218 = sbr.rel (%p216) target = $region32
        $region31: #{tpu_custom_call.1} parent=27 // pred_region
          %219 = dma.done %s212, 1024
        $region32: #{tpu_custom_call.1} parent=27 // pred_fallthru
          _
        %s220 = sand.u32 %s94, 1
        %s221 = scalar_lea.sflag [#allocation10], %s220
        %s222 = sand.u32 %s94, 1
        %s223 = smul.addr %s222, 64
        %s224 = scalar_lea.vmem [#allocation9], %s223
        // Predicated region
        $region33: #{tpu_custom_call.1} parent=27 // pred_check
          %p225 = pneg %p107
        $region34: #{tpu_custom_call.1} parent=27 // pred_check_branch
          %227 = sbr.rel (%p225) target = $region36
        $region35: #{tpu_custom_call.1} parent=27 // pred_region
          %228 = dma.done %s221, 1024
        $region36: #{tpu_custom_call.1} parent=27 // pred_fallthru
          _
        %s229 = sand.u32 %s68, 1
        %s230 = scalar_lea.sflag [#allocation7], %s229
        %s231 = sand.u32 %s68, 1
        %s232 = smul.addr %s231, 64
        %s233 = scalar_lea.vmem [#allocation6], %s232
        %p234 = pneg %p81
        %p235 = pneg %p78
        %s236 = sand.u32 %s94, 1
        %s237 = scalar_lea.sflag [#allocation10], %s236
        %s238 = sand.u32 %s94, 1
        %s239 = smul.addr %s238, 64
        %s240 = scalar_lea.vmem [#allocation9], %s239
        %p241 = pneg %p107
        %p242 = pneg %p104
        %p243 = pneg %p133
        %p244 = pneg %p130
        %s245 = sand.u32 %s120, 1
        %s246 = scalar_lea.sflag [#allocation8], %s245
        %s247 = sand.u32 %s120, 1
        %s248 = scalar_lea.vmem [#allocation11], %s247
        %s249 = sshra.s32 %s35, 7
        %s250 = sand.u32 %s35, 127
        %s251 = sadd.s32 %s249, %s34
        %s252 = smul.u32 %s251, 128
        %s253 = sshra.s32 %s35, 7
        %s254 = sand.u32 %s35, 127
        %s255 = sadd.s32 %s252, %s254
        %s256 = sld [smem:[#allocation5 + %s255]]
        %s257 = smul.u32 16, %s34
        %s258 = smul.u32 16, %s35
        %p260 = scmp.eq.s32.totalorder %s35, 0
        // Predicated region
        $region37: #{tpu_custom_call.1} parent=27 // pred_check
          %p261 = pneg %p260
        $region38: #{tpu_custom_call.1} parent=27 // pred_check_branch
          %263 = sbr.rel (%p261) target = $region40
        $region39: #{tpu_custom_call.1} parent=27 // pred_region
          %264 = vst [vmem:[#allocation2] sm:$0xff] 0.0
          %265 = vst [vmem:[#allocation2 + $0x8] sm:$0xff] 0.0
          %266 = vst [vmem:[#allocation2 + $0x10] sm:$0xff] 0.0
          %267 = vst [vmem:[#allocation2 + $0x18] sm:$0xff] 0.0
          %268 = vst [vmem:[#allocation2 + $0x20] sm:$0xff] 0.0
          %269 = vst [vmem:[#allocation2 + $0x28] sm:$0xff] 0.0
          %270 = vst [vmem:[#allocation2 + $0x30] sm:$0xff] 0.0
          %271 = vst [vmem:[#allocation2 + $0x38] sm:$0xff] 0.0
          %272 = vst [vmem:[#allocation2 + $0x40] sm:$0xff] 0.0
          %273 = vst [vmem:[#allocation2 + $0x48] sm:$0xff] 0.0
          %274 = vst [vmem:[#allocation2 + $0x50] sm:$0xff] 0.0
          %275 = vst [vmem:[#allocation2 + $0x58] sm:$0xff] 0.0
          %276 = vst [vmem:[#allocation2 + $0x60] sm:$0xff] 0.0
          %277 = vst [vmem:[#allocation2 + $0x68] sm:$0xff] 0.0
          %278 = vst [vmem:[#allocation2 + $0x70] sm:$0xff] 0.0
          %279 = vst [vmem:[#allocation2 + $0x78] sm:$0xff] 0.0
        $region40: #{tpu_custom_call.1} parent=27 // pred_fallthru
          _
        %s280 = sshra.s32 %s35, 7
        %s281 = sand.u32 %s35, 127
        %s282 = sadd.s32 %s280, %s34
        %s283 = smul.u32 %s282, 128
        %s284 = sshra.s32 %s35, 7
        %s285 = sand.u32 %s35, 127
        %s286 = sadd.s32 %s283, %s285
        %s287 = sld [smem:[#allocation4 + %s286]]
        %p288 = scmp.ne.s32.totalorder %s287, 0
        // Predicated region
        $region41: #{tpu_custom_call.1} parent=27 // pred_check
          %p289 = pneg %p288
        $region42: #{tpu_custom_call.1} parent=27 // pred_check_branch
          %291 = sbr.rel (%p289) target = $region44
        $region43: #{tpu_custom_call.1} parent=27 // pred_region
          %v292 = vld [vmem:[#allocation2] sm:$0xff]
          %v293 = vld [vmem:[#allocation2 + $0x8] sm:$0xff]
          %v294 = vld [vmem:[#allocation2 + $0x10] sm:$0xff]
          %v295 = vld [vmem:[#allocation2 + $0x18] sm:$0xff]
          %v296 = vld [vmem:[#allocation2 + $0x20] sm:$0xff]
          %v297 = vld [vmem:[#allocation2 + $0x28] sm:$0xff]
          %v298 = vld [vmem:[#allocation2 + $0x30] sm:$0xff]
          %v299 = vld [vmem:[#allocation2 + $0x38] sm:$0xff]
          %v300 = vld [vmem:[#allocation2 + $0x40] sm:$0xff]
          %v301 = vld [vmem:[#allocation2 + $0x48] sm:$0xff]
          %v302 = vld [vmem:[#allocation2 + $0x50] sm:$0xff]
          %v303 = vld [vmem:[#allocation2 + $0x58] sm:$0xff]
          %v304 = vld [vmem:[#allocation2 + $0x60] sm:$0xff]
          %v305 = vld [vmem:[#allocation2 + $0x68] sm:$0xff]
          %v306 = vld [vmem:[#allocation2 + $0x70] sm:$0xff]
          %v307 = vld [vmem:[#allocation2 + $0x78] sm:$0xff]
          %v308 = vld [vmem:[%s215] sm:$0xf]
          %v309 = vld [vmem:[%s215 + $0x4] sm:$0xf]
          %v310 = vld [vmem:[%s215 + $0x8] sm:$0xf]
          %v311 = vld [vmem:[%s215 + $0xc] sm:$0xf]
          %v312 = vld [vmem:[%s215 + $0x10] sm:$0xf]
          %v313 = vld [vmem:[%s215 + $0x14] sm:$0xf]
          %v314 = vld [vmem:[%s215 + $0x18] sm:$0xf]
          %v315 = vld [vmem:[%s215 + $0x1c] sm:$0xf]
          %v316 = vld [vmem:[%s215 + $0x20] sm:$0xf]
          %v317 = vld [vmem:[%s215 + $0x24] sm:$0xf]
          %v318 = vld [vmem:[%s215 + $0x28] sm:$0xf]
          %v319 = vld [vmem:[%s215 + $0x2c] sm:$0xf]
          %v320 = vld [vmem:[%s215 + $0x30] sm:$0xf]
          %v321 = vld [vmem:[%s215 + $0x34] sm:$0xf]
          %v322 = vld [vmem:[%s215 + $0x38] sm:$0xf]
          %v323 = vld [vmem:[%s215 + $0x3c] sm:$0xf]
          %v324 = vld [vmem:[%s224] sm:$0xf]
          %v325 = vld [vmem:[%s224 + $0x4] sm:$0xf]
          %v326 = vld [vmem:[%s224 + $0x8] sm:$0xf]
          %v327 = vld [vmem:[%s224 + $0xc] sm:$0xf]
          %v328 = vld [vmem:[%s224 + $0x10] sm:$0xf]
          %v329 = vld [vmem:[%s224 + $0x14] sm:$0xf]
          %v330 = vld [vmem:[%s224 + $0x18] sm:$0xf]
          %v331 = vld [vmem:[%s224 + $0x1c] sm:$0xf]
          %v332 = vld [vmem:[%s224 + $0x20] sm:$0xf]
          %v333 = vld [vmem:[%s224 + $0x24] sm:$0xf]
          %v334 = vld [vmem:[%s224 + $0x28] sm:$0xf]
          %v335 = vld [vmem:[%s224 + $0x2c] sm:$0xf]
          %v336 = vld [vmem:[%s224 + $0x30] sm:$0xf]
          %v337 = vld [vmem:[%s224 + $0x34] sm:$0xf]
          %v338 = vld [vmem:[%s224 + $0x38] sm:$0xf]
          %v339 = vld [vmem:[%s224 + $0x3c] sm:$0xf]
          %v356 = vunpack.c.l.b16 %v308
          %v357 = vunpack.c.l.b16 %v309
          %v358 = vunpack.c.l.b16 %v310
          %v359 = vunpack.c.l.b16 %v311
          %v360 = vunpack.c.l.b16 %v312
          %v361 = vunpack.c.l.b16 %v313
          %v362 = vunpack.c.l.b16 %v314
          %v363 = vunpack.c.l.b16 %v315
          %v364 = vunpack.c.l.b16 %v316
          %v365 = vunpack.c.l.b16 %v317
          %v366 = vunpack.c.l.b16 %v318
          %v367 = vunpack.c.l.b16 %v319
          %v368 = vunpack.c.l.b16 %v320
          %v369 = vunpack.c.l.b16 %v321
          %v370 = vunpack.c.l.b16 %v322
          %v371 = vunpack.c.l.b16 %v323
          %v372 = vpack.c.b16 %v357, %v356
          %v373 = vpack.c.b16 %v359, %v358
          %v374 = vpack.c.b16 %v361, %v360
          %v375 = vpack.c.b16 %v363, %v362
          %v376 = vpack.c.b16 %v365, %v364
          %v377 = vpack.c.b16 %v367, %v366
          %v378 = vpack.c.b16 %v369, %v368
          %v379 = vpack.c.b16 %v371, %v370
          %v404 = vunpack.c.l.b16 %v324
          %v405 = vunpack.c.l.b16 %v325
          %v406 = vunpack.c.l.b16 %v326
          %v407 = vunpack.c.l.b16 %v327
          %v408 = vunpack.c.l.b16 %v328
          %v409 = vunpack.c.l.b16 %v329
          %v410 = vunpack.c.l.b16 %v330
          %v411 = vunpack.c.l.b16 %v331
          %v412 = vunpack.c.l.b16 %v332
          %v413 = vunpack.c.l.b16 %v333
          %v414 = vunpack.c.l.b16 %v334
          %v415 = vunpack.c.l.b16 %v335
          %v416 = vunpack.c.l.b16 %v336
          %v417 = vunpack.c.l.b16 %v337
          %v418 = vunpack.c.l.b16 %v338
          %v419 = vunpack.c.l.b16 %v339
          %v420 = vpack.c.b16 %v405, %v404
          %v421 = vpack.c.b16 %v407, %v406
          %v422 = vpack.c.b16 %v409, %v408
          %v423 = vpack.c.b16 %v411, %v410
          %v424 = vpack.c.b16 %v413, %v412
          %v425 = vpack.c.b16 %v415, %v414
          %v426 = vpack.c.b16 %v417, %v416
          %v427 = vpack.c.b16 %v419, %v418
          %436 = vmatprep.subr.bf16.mxu0 0
          %437 = vmatpush1.bf16.msra.mxu0 %v420
          %438 = vmatprep.subr.bf16.mxu0 0
          %439 = vmatpush1.bf16.msra.mxu0 %v421
          %440 = vmatprep.subr.bf16.mxu0 0
          %441 = vmatpush1.bf16.msra.mxu0 %v422
          %442 = vmatprep.subr.bf16.mxu0 0
          %443 = vmatpush1.bf16.msra.mxu0 %v423
          %444 = vmatprep.subr.bf16.mxu0 0
          %445 = vmatpush1.bf16.msra.mxu0 %v424
          %446 = vmatprep.subr.bf16.mxu0 0
          %447 = vmatpush1.bf16.msra.mxu0 %v425
          %448 = vmatprep.subr.bf16.mxu0 0
          %449 = vmatpush1.bf16.msra.mxu0 %v426
          %450 = vmatprep.subr.bf16.mxu0 0
          %451 = vmatpush1.bf16.msra.mxu0 %v427
          %452 = vmatprep.subr.bf16.mxu0 0
          %453 = vmatpush1.bf16.msra.mxu0 0
          %454 = vmatprep.subr.bf16.mxu0 0
          %455 = vmatpush1.bf16.msra.mxu0 0
          %456 = vmatprep.subr.bf16.mxu0 0
          %457 = vmatpush1.bf16.msra.mxu0 0
          %458 = vmatprep.subr.bf16.mxu0 0
          %459 = vmatpush1.bf16.msra.mxu0 0
          %460 = vmatprep.subr.bf16.mxu0 0
          %461 = vmatpush1.bf16.msra.mxu0 0
          %462 = vmatprep.subr.bf16.mxu0 0
          %463 = vmatpush1.bf16.msra.mxu0 0
          %464 = vmatprep.subr.bf16.mxu0 0
          %465 = vmatpush1.bf16.msra.mxu0 0
          %466 = vmatprep.subr.bf16.mxu0 0
          %467 = vmatpush1.bf16.msra.mxu0 0
          %468 = vmatprep.mubr.bf16.mxu0 0
          %469 = vmatmul.mubr.bf16.gmra.mrb[0].mxu0 %v372
          %v470 = vpop.f32.mrb[0].mxu0
          %v471 = vadd.f32 0.0, %v470
          %v472 = vpop.f32.mrb[0].mxu0
          %v473 = vpop.f32.mrb[0].mxu0
          %v474 = vadd.f32 0.0, %v473
          %v475 = vpop.f32.mrb[0].mxu0
          %476 = vmatprep.mubr.bf16.mxu0 0
          %477 = vmatmul.mubr.bf16.gmra.mrb[0].mxu0 %v373
          %v478 = vpop.f32.mrb[0].mxu0
          %v479 = vadd.f32 0.0, %v478
          %v480 = vpop.f32.mrb[0].mxu0
          %v481 = vpop.f32.mrb[0].mxu0
          %v482 = vadd.f32 0.0, %v481
          %v483 = vpop.f32.mrb[0].mxu0
          %484 = vmatprep.mubr.bf16.mxu0 0
          %485 = vmatmul.mubr.bf16.gmra.mrb[0].mxu0 %v374
          %v486 = vpop.f32.mrb[0].mxu0
          %v487 = vadd.f32 0.0, %v486
          %v488 = vpop.f32.mrb[0].mxu0
          %v489 = vpop.f32.mrb[0].mxu0
          %v490 = vadd.f32 0.0, %v489
          %v491 = vpop.f32.mrb[0].mxu0
          %492 = vmatprep.mubr.bf16.mxu0 0
          %493 = vmatmul.mubr.bf16.gmra.mrb[0].mxu0 %v375
          %v494 = vpop.f32.mrb[0].mxu0
          %v495 = vadd.f32 0.0, %v494
          %v496 = vpop.f32.mrb[0].mxu0
          %v497 = vpop.f32.mrb[0].mxu0
          %v498 = vadd.f32 0.0, %v497
          %v499 = vpop.f32.mrb[0].mxu0
          %500 = vmatprep.mubr.bf16.mxu0 0
          %501 = vmatmul.mubr.bf16.gmra.mrb[0].mxu0 %v376
          %v502 = vpop.f32.mrb[0].mxu0
          %v503 = vadd.f32 0.0, %v502
          %v504 = vpop.f32.mrb[0].mxu0
          %v505 = vpop.f32.mrb[0].mxu0
          %v506 = vadd.f32 0.0, %v505
          %v507 = vpop.f32.mrb[0].mxu0
          %508 = vmatprep.mubr.bf16.mxu0 0
          %509 = vmatmul.mubr.bf16.gmra.mrb[0].mxu0 %v377
          %v510 = vpop.f32.mrb[0].mxu0
          %v511 = vadd.f32 0.0, %v510
          %v512 = vpop.f32.mrb[0].mxu0
          %v513 = vpop.f32.mrb[0].mxu0
          %v514 = vadd.f32 0.0, %v513
          %v515 = vpop.f32.mrb[0].mxu0
          %516 = vmatprep.mubr.bf16.mxu0 0
          %517 = vmatmul.mubr.bf16.gmra.mrb[0].mxu0 %v378
          %v518 = vpop.f32.mrb[0].mxu0
          %v519 = vadd.f32 0.0, %v518
          %v520 = vpop.f32.mrb[0].mxu0
          %v521 = vpop.f32.mrb[0].mxu0
          %v522 = vadd.f32 0.0, %v521
          %v523 = vpop.f32.mrb[0].mxu0
          %524 = vmatprep.mubr.bf16.mxu0 0
          %525 = vmatmul.mubr.bf16.gmra.mrb[0].mxu0 %v379
          %v526 = vpop.f32.mrb[0].mxu0
          %v527 = vadd.f32 0.0, %v526
          %v528 = vpop.f32.mrb[0].mxu0
          %v529 = vpop.f32.mrb[0].mxu0
          %v530 = vadd.f32 0.0, %v529
          %v531 = vpop.f32.mrb[0].mxu0
          %532 = vdwg.mxu0
          %v533 = vadd.f32 %v292, %v471
          %v534 = vadd.f32 %v293, %v474
          %v535 = vadd.f32 %v294, %v479
          %v536 = vadd.f32 %v295, %v482
          %v537 = vadd.f32 %v296, %v487
          %v538 = vadd.f32 %v297, %v490
          %v539 = vadd.f32 %v298, %v495
          %v540 = vadd.f32 %v299, %v498
          %v541 = vadd.f32 %v300, %v503
          %v542 = vadd.f32 %v301, %v506
          %v543 = vadd.f32 %v302, %v511
          %v544 = vadd.f32 %v303, %v514
          %v545 = vadd.f32 %v304, %v519
          %v546 = vadd.f32 %v305, %v522
          %v547 = vadd.f32 %v306, %v527
          %v548 = vadd.f32 %v307, %v530
          %549 = vst [vmem:[#allocation2] sm:$0xff] %v533
          %550 = vst [vmem:[#allocation2 + $0x8] sm:$0xff] %v534
          %551 = vst [vmem:[#allocation2 + $0x10] sm:$0xff] %v535
          %552 = vst [vmem:[#allocation2 + $0x18] sm:$0xff] %v536
          %553 = vst [vmem:[#allocation2 + $0x20] sm:$0xff] %v537
          %554 = vst [vmem:[#allocation2 + $0x28] sm:$0xff] %v538
          %555 = vst [vmem:[#allocation2 + $0x30] sm:$0xff] %v539
          %556 = vst [vmem:[#allocation2 + $0x38] sm:$0xff] %v540
          %557 = vst [vmem:[#allocation2 + $0x40] sm:$0xff] %v541
          %558 = vst [vmem:[#allocation2 + $0x48] sm:$0xff] %v542
          %559 = vst [vmem:[#allocation2 + $0x50] sm:$0xff] %v543
          %560 = vst [vmem:[#allocation2 + $0x58] sm:$0xff] %v544
          %561 = vst [vmem:[#allocation2 + $0x60] sm:$0xff] %v545
          %562 = vst [vmem:[#allocation2 + $0x68] sm:$0xff] %v546
          %563 = vst [vmem:[#allocation2 + $0x70] sm:$0xff] %v547
          %564 = vst [vmem:[#allocation2 + $0x78] sm:$0xff] %v548
        $region44: #{tpu_custom_call.1} parent=27 // pred_fallthru
          _
        %p565 = scmp.eq.s32.totalorder %s35, 3
        // Predicated region
        $region45: #{tpu_custom_call.1} parent=27 // pred_check
          %p566 = pneg %p565
        $region46: #{tpu_custom_call.1} parent=27 // pred_check_branch
          %568 = sbr.rel (%p566) target = $region48
        $region47: #{tpu_custom_call.1} parent=27 // pred_region
          %v569 = vld [vmem:[#allocation2] sm:$0xff]
          %v570 = vld [vmem:[#allocation2 + $0x8] sm:$0xff]
          %v571 = vld [vmem:[#allocation2 + $0x10] sm:$0xff]
          %v572 = vld [vmem:[#allocation2 + $0x18] sm:$0xff]
          %v573 = vld [vmem:[#allocation2 + $0x20] sm:$0xff]
          %v574 = vld [vmem:[#allocation2 + $0x28] sm:$0xff]
          %v575 = vld [vmem:[#allocation2 + $0x30] sm:$0xff]
          %v576 = vld [vmem:[#allocation2 + $0x38] sm:$0xff]
          %v577 = vld [vmem:[#allocation2 + $0x40] sm:$0xff]
          %v578 = vld [vmem:[#allocation2 + $0x48] sm:$0xff]
          %v579 = vld [vmem:[#allocation2 + $0x50] sm:$0xff]
          %v580 = vld [vmem:[#allocation2 + $0x58] sm:$0xff]
          %v581 = vld [vmem:[#allocation2 + $0x60] sm:$0xff]
          %v582 = vld [vmem:[#allocation2 + $0x68] sm:$0xff]
          %v583 = vld [vmem:[#allocation2 + $0x70] sm:$0xff]
          %v584 = vld [vmem:[#allocation2 + $0x78] sm:$0xff]
          %v585 = vmul.f32 %v569, %v569
          %v586 = vmul.f32 %v570, %v570
          %v587 = vmul.f32 %v571, %v571
          %v588 = vmul.f32 %v572, %v572
          %v589 = vmul.f32 %v573, %v573
          %v590 = vmul.f32 %v574, %v574
          %v591 = vmul.f32 %v575, %v575
          %v592 = vmul.f32 %v576, %v576
          %v593 = vmul.f32 %v577, %v577
          %v594 = vmul.f32 %v578, %v578
          %v595 = vmul.f32 %v579, %v579
          %v596 = vmul.f32 %v580, %v580
          %v597 = vmul.f32 %v581, %v581
          %v598 = vmul.f32 %v582, %v582
          %v599 = vmul.f32 %v583, %v583
          %v600 = vmul.f32 %v584, %v584
          %v601 = vadd.f32 %v585, %v586
          %v602 = vadd.f32 %v601, %v587
          %v603 = vadd.f32 %v602, %v588
          %v604 = vadd.f32 %v603, %v589
          %v605 = vadd.f32 %v604, %v590
          %v606 = vadd.f32 %v605, %v591
          %v607 = vadd.f32 %v606, %v592
          %v608 = vadd.f32 %v607, %v593
          %v609 = vadd.f32 %v608, %v594
          %v610 = vadd.f32 %v609, %v595
          %v611 = vadd.f32 %v610, %v596
          %v612 = vadd.f32 %v611, %v597
          %v613 = vadd.f32 %v612, %v598
          %v614 = vadd.f32 %v613, %v599
          %v615 = vadd.f32 %v614, %v600
          %v616 = vrot.slane %v615, 4
          %v617 = vadd.f32 %v615, %v616
          %v618 = vrot.slane %v617, 2
          %v619 = vadd.f32 %v617, %v618
          %v620 = vrot.slane %v619, 1
          %v621 = vadd.f32 %v619, %v620
          %622 = vst [vmem:[%s248] sm:$0x1] %v621
        $region48: #{tpu_custom_call.1} parent=27 // pred_fallthru
          _
        %s623 = sand.u32 %s120, 1
        %s624 = scalar_lea.sflag [#allocation8], %s623
        %s625 = sand.u32 %s120, 1
        %s626 = scalar_lea.vmem [#allocation11], %s625
        // Predicated region
        $region49: #{tpu_custom_call.1} parent=27 // pred_check
          %p627 = pneg %p130
        $region50: #{tpu_custom_call.1} parent=27 // pred_check_branch
          %629 = sbr.rel (%p627) target = $region52
        $region51: #{tpu_custom_call.1} parent=27 // pred_region
          %s631 = ssub.s32 16, 16
          %632 = vsyncadd %s624, %s631
          %s633 = smul.addr %s34, 16
          %s634 = scalar_lea.hbm %s4, %s633
          %s636 = sshll.u32 %s626, 4
          %s637 = int_to_ptr.vmem [resolvable:$true] %s636
          %639 = dma.vmem_to_hbm [thread:$0]  %s637, 16, %s634, %s624
        $region52: #{tpu_custom_call.1} parent=27 // pred_fallthru
          _
      $region28: #{tpu_custom_call.1} parent=5 // pred_fallthru
        _
      %p640 = scmp.le.s32.totalorder 2, %s25
      // Predicated region
      $region53: #{tpu_custom_call.1} parent=5 // pred_check
        %p641 = pneg %p640
      $region54: #{tpu_custom_call.1} parent=5 // pred_check_branch
        %643 = sbr.rel (%p641) target = $region56
      $region55: #{tpu_custom_call.1} parent=5 // pred_region
        %s644 = ssub.s32 %s25, 2
        // Predicated region
        $region57: #{tpu_custom_call.1} parent=55 // pred_check
          %p645 = pneg %p136
        $region58: #{tpu_custom_call.1} parent=55 // pred_check_branch
          %647 = sbr.rel (%p645) target = $region60
        $region59: #{tpu_custom_call.1} parent=55 // pred_region
          %s648 = sand.u32 %s121, 1
          %s649 = scalar_lea.sflag [#allocation8], %s648
          %s650 = sand.u32 %s121, 1
          %s651 = scalar_lea.vmem [#allocation11], %s650
          %652 = dma.done %s649, 16
        $region60: #{tpu_custom_call.1} parent=55 // pred_fallthru
          _
      $region56: #{tpu_custom_call.1} parent=5 // pred_fallthru
        _
    $region6: #{tpu_custom_call.1} parent=1 // loop_footer
      %s29 = sadd.s32 1, %s25
    $region7: #{tpu_custom_call.1} parent=1 // loop_footer_branch
      %24 = sbr.rel target = $region3
    $region8: #{tpu_custom_call.1} parent=1 // loop_exit
      _
    %653 = vsyncpa [#allocation7], 1
    %s654 = scalar_lea.sflag [#allocation7], 1
    %655 = vsyncpa %s654, 1
    %656 = vsyncpa [#allocation10], 1
    %s657 = scalar_lea.sflag [#allocation10], 1
    %658 = vsyncpa %s657, 1
    %659 = vsyncpa [#allocation8], 1
    %s660 = scalar_lea.sflag [#allocation8], 1
    %661 = vsyncpa %s660, 1

</llo_original>
